<compile_context>
chip_gen: v7x
topology: tpu7x:2x2x1
jax: 0.10.0
libtpu: 0.0.40
codegen_flags: <defaults>
</compile_context>

<pallas_src>
import functools

import jax
import jax.numpy as jnp
from jax import lax
from jax.experimental import pallas as pl
from jax.experimental.pallas import tpu as pltpu


def _round_up(x, m):
    return (x + m - 1) // m * m


def _largest_divisor_leq(n, cap):
    cap = max(1, min(n, cap))
    for d in range(cap, 0, -1):
        if n % d == 0:
            return d
    return 1


def _vmem_limit_bytes():
    # ~3/4 of physical VMEM, capped at 96 MiB (v5e/v6e: 96 MiB, v7x: 48 MiB).
    try:
        cap = int(pltpu.get_tpu_info().vmem_capacity_bytes)
        if cap > 0:
            return int(min(cap * 3 // 4, 96 * 1024 * 1024))
    except Exception:
        pass
    return 48 * 1024 * 1024


def _pick_row_tile(Ho, Wo, out_row_bytes, extra_row_bytes=0,
                   target_rows=1024, tile_cap_bytes=8 << 20):
    # Aim for ~1024 matmul rows per step (amortize ~0.35us/step, fill the MXU) while
    # capping the per-step VMEM footprint.
    th = max(1, target_rows // max(Wo, 1))
    row_bytes = max(1, out_row_bytes + extra_row_bytes)
    th = min(th, max(1, tile_cap_bytes // row_bytes))
    return max(1, min(th, Ho))


# ---------------------------------------------------------------------------
# Conv kernels (emit conv output tile + per-tile [sum, sum-of-squares] stats)
# ---------------------------------------------------------------------------

def _conv_folded_kernel(xf_ref, w_ref, y_ref, st_ref, *, TH, Wo):
    """Tap-folded conv: one (TH*Wo, Kf_p) x (Kf_p, Co_p) MXU matmul per tile.

    xf_ref : (1, TH, Wo, Kf_p)  im2col-along-channels input tile (lane-dense)
    w_ref  : (Kf_p, Co_p)       folded weight matrix
    y_ref  : (1, TH, Wo, Co_p)  conv output tile (compute dtype)
    st_ref : (1, 1, 2, Co_p)    per-tile [sum, sum-of-squares]
    """
    x = xf_ref[0].reshape(TH * Wo, xf_ref.shape[-1])
    acc = jnp.dot(x, w_ref[...], preferred_element_type=jnp.float32)  # local f32 acc
    y_ref[0] = acc.reshape(TH, Wo, acc.shape[-1]).astype(y_ref.dtype)
    rsum = jnp.sum(acc, axis=0, keepdims=True)
    rssq = jnp.sum(acc * acc, axis=0, keepdims=True)
    st_ref[0, 0] = jnp.concatenate([rsum, rssq], axis=0)


def _conv_tap_kernel(xp_hbm, w_ref, y_ref, st_ref, xbuf, sem, *,
                     TH, Wo, Ho, stride, mask_rows):
    """Per-tap conv for large channel counts: 9 shift-and-accumulate MXU matmuls over a
    manually double-buffered halo row tile (input stays in HBM, memory_space=pl.ANY).

    xp_hbm : (N, Hp, Wp, Ci_p) in HBM
    w_ref  : (9, Ci_p, Co_p)
    xbuf   : (2, HB, Wp, Ci_p) VMEM double buffer, HB = (TH-1)*stride + 3
    sem    : DMA semaphores (2,)
    """
    n = pl.program_id(0)
    h = pl.program_id(1)
    HB = (TH - 1) * stride + 3
    slot = h % 2

    def start_fetch(hh, sl):
        pltpu.make_async_copy(
            xp_hbm.at[n, pl.ds(hh * (TH * stride), HB), :, :],
            xbuf.at[sl], sem.at[sl]).start()

    @pl.when(h == 0)
    def _():                       # prime the pipeline once per image
        start_fetch(0, 0)

    @pl.when(h + 1 < pl.num_programs(1))
    def _():                       # prefetch next row tile while computing this one
        start_fetch(h + 1, 1 - slot)

    pltpu.make_async_copy(          # wait for the current tile
        xp_hbm.at[n, pl.ds(0, HB), :, :], xbuf.at[slot], sem.at[slot]).wait()

    acc = None                      # local accumulation (vregs / MXU result buffer)
    for ki in range(3):
        for kj in range(3):
            if stride == 1:
                patch = xbuf[slot, pl.ds(ki, TH), pl.ds(kj, Wo), :]
            else:
                # TODO(synk): pre-deinterleave even/odd rows/cols in the wrapper to avoid
                # strided sublane loads in the inner loop (perf only).
                patch = xbuf[slot, pl.ds(ki, TH, stride=stride),
                             pl.ds(kj, Wo, stride=stride), :]
            pm = patch.reshape(TH * Wo, patch.shape[-1])
            d = jnp.dot(pm, w_ref[3 * ki + kj], preferred_element_type=jnp.float32)
            acc = d if acc is None else acc + d

    y_ref[0] = acc.reshape(TH, Wo, acc.shape[-1]).astype(y_ref.dtype)

    if mask_rows:                   # exclude zero-padded output rows from the stats
        r = lax.broadcasted_iota(jnp.int32, (TH * Wo, 1), 0)
        valid = ((h * TH + r // Wo) < Ho).astype(jnp.float32)
        accm = acc * valid
    else:
        accm = acc
    rsum = jnp.sum(accm, axis=0, keepdims=True)
    rssq = jnp.sum(accm * acc, axis=0, keepdims=True)
    st_ref[0, 0] = jnp.concatenate([rsum, rssq], axis=0)


def _bn_relu_kernel(y_ref, scale_ref, shift_ref, o_ref):
    # y * (gamma * rsqrt(var+eps)) + (beta - mean * that), then ReLU. Pure HBM streaming.
    y = y_ref[...].astype(jnp.float32)
    o_ref[...] = jnp.maximum(y * scale_ref[...] + shift_ref[...], 0.0)


# ---------------------------------------------------------------------------
# Wrapper
# ---------------------------------------------------------------------------

def conv3x3_bn_relu(x_nchw, weight, gamma, beta, *, stride=1, eps=1e-5,
                    compute_dtype=jnp.bfloat16, force_tap_path=False):
    """x: (N, C_in, H, W) f32 NCHW; weight: (C_out, C_in, 3, 3). Returns NCHW f32."""
    N, C_in, H, W = x_nchw.shape
    C_out = weight.shape[0]
    pad = 1
    Ho = (H + 2 * pad - 3) // stride + 1
    Wo = (W + 2 * pad - 3) // stride + 1
    Ci_p = _round_up(C_in, 128)
    Co_p = _round_up(C_out, 128)
    in_bytes = jnp.dtype(compute_dtype).itemsize
    vmem_limit = _vmem_limit_bytes()

    # NCHW -> NHWC (lane-dense channels).
    # TODO(synk): keep NHWC as the external layout (and fuse the final channel slice /
    # NCHW transpose) to avoid full-tensor layout passes around the kernels.
    x = jnp.transpose(x_nchw, (0, 2, 3, 1)).astype(jnp.float32)

    Kf = 9 * C_in
    Kf_p = _round_up(Kf, 128)
    # Fold taps into the matmul K axis when it does not meaningfully inflate the padded
    # channel width: one matmul per tile instead of 9 mostly-zero-K matmuls.
    use_folded = (not force_tap_path) and (Kf_p <= 2 * Ci_p)
    y_dtype = compute_dtype   # bf16 intermediate on the fast path => less HBM traffic

    if use_folded:
        TH = _pick_row_tile(Ho, Wo, Wo * Co_p * 4, Wo * Kf_p * in_bytes)
        Ho_p = _round_up(Ho, TH)
        nH = Ho_p // TH

        xp = jnp.pad(x, ((0, 0), (pad, pad), (pad, pad), (0, 0)))
        taps = []
        for ki in range(3):
            for kj in range(3):
                taps.append(xp[:, ki:ki + (Ho - 1) * stride + 1:stride,
                               kj:kj + (Wo - 1) * stride + 1:stride, :])
        xf = jnp.concatenate(taps, axis=-1)                       # (N, Ho, Wo, 9*C_in)
        xf = jnp.pad(xf, ((0, 0), (0, Ho_p - Ho), (0, 0), (0, Kf_p - Kf)))
        xf = xf.astype(compute_dtype)

        wf = jnp.transpose(weight.astype(jnp.float32), (2, 3, 1, 0)).reshape(Kf, C_out)
        wf = jnp.pad(wf, ((0, Kf_p - Kf), (0, Co_p - C_out))).astype(compute_dtype)

        y, stats = pl.pallas_call(
            functools.partial(_conv_folded_kernel, TH=TH, Wo=Wo),
            out_shape=(jax.ShapeDtypeStruct((N, Ho_p, Wo, Co_p), y_dtype),
                       jax.ShapeDtypeStruct((N, nH, 2, Co_p), jnp.float32)),
            grid=(N, nH),
            in_specs=[pl.BlockSpec((1, TH, Wo, Kf_p), lambda n, h: (n, h, 0, 0)),
                      pl.BlockSpec((Kf_p, Co_p), lambda n, h: (0, 0))],
            out_specs=(pl.BlockSpec((1, TH, Wo, Co_p), lambda n, h: (n, h, 0, 0)),
                       pl.BlockSpec((1, 1, 2, Co_p), lambda n, h: (n, h, 0, 0))),
            compiler_params=pltpu.CompilerParams(
                dimension_semantics=("parallel", "parallel"),
                vmem_limit_bytes=vmem_limit),
        )(xf, wf)
    else:
        Wp = W + 2 * pad
        TH = _pick_row_tile(Ho, Wo, Wo * Co_p * 4,
                            extra_row_bytes=2 * stride * Wp * Ci_p * in_bytes)
        Ho_p = _round_up(Ho, TH)
        nH = Ho_p // TH
        HB = (TH - 1) * stride + 3
        Hp_need = max((Ho_p - 1) * stride + 3, H + 2 * pad)

        xp = jnp.pad(x, ((0, 0), (pad, Hp_need - H - pad), (pad, pad),
                         (0, Ci_p - C_in))).astype(compute_dtype)

        wt = jnp.transpose(weight.astype(jnp.float32),
                           (2, 3, 1, 0)).reshape(9, C_in, C_out)
        wt = jnp.pad(wt, ((0, 0), (0, Ci_p - C_in),
                          (0, Co_p - C_out))).astype(compute_dtype)
        # TODO(synk): the weight block is still double-buffered by the pipeline although
        # its index never changes; single-buffering would save 9*Ci_p*Co_p*itemsize VMEM.

        y, stats = pl.pallas_call(
            functools.partial(_conv_tap_kernel, TH=TH, Wo=Wo, Ho=Ho, stride=stride,
                              mask_rows=(Ho_p != Ho)),
            out_shape=(jax.ShapeDtypeStruct((N, Ho_p, Wo, Co_p), y_dtype),
                       jax.ShapeDtypeStruct((N, nH, 2, Co_p), jnp.float32)),
            grid=(N, nH),
            in_specs=[pl.BlockSpec(memory_space=pl.ANY),       # image stays in HBM
                      pl.BlockSpec((9, Ci_p, Co_p), lambda n, h: (0, 0, 0))],
            out_specs=(pl.BlockSpec((1, TH, Wo, Co_p), lambda n, h: (n, h, 0, 0)),
                       pl.BlockSpec((1, 1, 2, Co_p), lambda n, h: (n, h, 0, 0))),
            scratch_shapes=[pltpu.VMEM((2, HB, Wp, Ci_p), compute_dtype),
                            pltpu.SemaphoreType.DMA((2,))],
            compiler_params=pltpu.CompilerParams(
                dimension_semantics=("parallel", "arbitrary"),
                vmem_limit_bytes=vmem_limit),
        )(xp, wt)

    # Fold per-tile partial stats into per-channel BN scale/shift (train-mode batch
    # statistics, biased variance).  Padded output rows contribute exactly zero.
    cnt = jnp.float32(N * Ho * Wo)
    tot = jnp.sum(stats, axis=(0, 1))                 # (2, Co_p)
    mean = tot[0] / cnt
    # TODO(synk): E[x^2]-mean^2 can cancel in f32 when |mean| >> std; clamp avoids NaNs.
    var = jnp.maximum(tot[1] / cnt - mean * mean, 0.0)
    gamma_p = jnp.pad(gamma.astype(jnp.float32), (0, Co_p - C_out))
    beta_p = jnp.pad(beta.astype(jnp.float32), (0, Co_p - C_out))
    scale = gamma_p * lax.rsqrt(var + eps)
    shift = beta_p - mean * scale

    # BN + ReLU: pure HBM streaming, tiled independently of the conv tile with large
    # lane-dense blocks over the flattened (N*Ho_p) row axis.
    Mrows = N * Ho_p
    row_bytes = Wo * Co_p * (4 + jnp.dtype(y_dtype).itemsize)
    R2 = _largest_divisor_leq(Mrows, max(1, (8 << 20) // row_bytes))
    y3 = y.reshape(Mrows, Wo, Co_p)

    out = pl.pallas_call(
        _bn_relu_kernel,
        out_shape=jax.ShapeDtypeStruct((Mrows, Wo, Co_p), jnp.float32),
        grid=(Mrows // R2,),
        in_specs=[pl.BlockSpec((R2, Wo, Co_p), lambda i: (i, 0, 0)),
                  pl.BlockSpec((1, 1, Co_p), lambda i: (0, 0, 0)),
                  pl.BlockSpec((1, 1, Co_p), lambda i: (0, 0, 0))],
        out_specs=pl.BlockSpec((R2, Wo, Co_p), lambda i: (i, 0, 0)),
        compiler_params=pltpu.CompilerParams(
            dimension_semantics=("parallel",),
            vmem_limit_bytes=vmem_limit),
    )(y3, scale.reshape(1, 1, Co_p), shift.reshape(1, 1, Co_p))

    out = out.reshape(N, Ho_p, Wo, Co_p)[:, :Ho, :, :C_out]
    return jnp.transpose(out, (0, 3, 1, 2))           # back to NCHW


# ---------------------------------------------------------------------------
# Reference & test
# ---------------------------------------------------------------------------

def _reference(x_nchw, weight, gamma, beta, *, stride=1, eps=1e-5):
    y = lax.conv_general_dilated(
        x_nchw, weight, (stride, stride), ((1, 1), (1, 1)),
        dimension_numbers=("NCHW", "OIHW", "NCHW"))
    mean = jnp.mean(y, axis=(0, 2, 3), keepdims=True)
    var = jnp.mean((y - mean) ** 2, axis=(0, 2, 3), keepdims=True)
    yn = (y - mean) / jnp.sqrt(var + eps)
    yn = yn * gamma.reshape(1, -1, 1, 1) + beta.reshape(1, -1, 1, 1)
    return jnp.maximum(yn, 0.0)


if __name__ == "__main__":
    N, C, H, W = 2, 4, 16, 16

    key = jax.random.PRNGKey(0)
    kx, kw = jax.random.split(key)
    x = jax.random.normal(kx, (N, C, H, W), dtype=jnp.float32)
    # Conv2d(C, C, 3, stride, padding=1, bias=False): weight shape (C, C, 3, 3)
    weight = jax.random.normal(kw, (C, C, 3, 3), dtype=jnp.float32) * 0.2
    # BatchNorm2d(C, affine=True) default init: gamma=1, beta=0
    gamma = jnp.ones((C,), dtype=jnp.float32)
    beta = jnp.zeros((C,), dtype=jnp.float32)

    # Folded (small-channel) path, exact f32, stride 1 and 2.
    for stride in (1, 2):
        ref = _reference(x, weight, gamma, beta, stride=stride)
        out = jax.block_until_ready(conv3x3_bn_relu(
            x, weight, gamma, beta, stride=stride, compute_dtype=jnp.float32))
        assert out.shape == ref.shape
        assert jnp.allclose(out, ref, rtol=1e-3, atol=1e-3), f"f32 folded s={stride}"

    ref1 = _reference(x, weight, gamma, beta, stride=1)

    # Folded fast path with bf16 MXU inputs + bf16 intermediate.
    out_bf = jax.block_until_ready(conv3x3_bn_relu(
        x, weight, gamma, beta, stride=1, compute_dtype=jnp.bfloat16))
    assert jnp.allclose(out_bf, ref1, rtol=3e-2, atol=3e-2), "bf16 folded path"

    # Per-tap halo-DMA path (normally used for large channel counts), forced for coverage.
    out_tap = jax.block_until_ready(conv3x3_bn_relu(
        x, weight, gamma, beta, stride=1, compute_dtype=jnp.float32,
        force_tap_path=True))
    assert jnp.allclose(out_tap, ref1, rtol=1e-3, atol=1e-3), "f32 tap path"
    out_tap_bf = jax.block_until_ready(conv3x3_bn_relu(
        x, weight, gamma, beta, stride=1, compute_dtype=jnp.bfloat16,
        force_tap_path=True))
    assert jnp.allclose(out_tap_bf, ref1, rtol=3e-2, atol=3e-2), "bf16 tap path"

    print("KERNEL_OK")
</pallas_src>

<mosaic_0001>
module attributes {stable_mosaic.version = 11 : i64} {
  func.func @_conv_folded_kernel(%arg0: i32, %arg1: i32, %arg2: memref<1x16x16x128xf32, #tpu.memory_space<vmem>>, %arg3: memref<128x128xf32, #tpu.memory_space<vmem>>, %arg4: memref<1x16x16x128xf32, #tpu.memory_space<vmem>>, %arg5: memref<1x1x2x128xf32, #tpu.memory_space<vmem>>) attributes {dimension_semantics = [#tpu.dimension_semantics<parallel>, #tpu.dimension_semantics<parallel>], iteration_bounds = array<i64: 2, 1>, scalar_prefetch = 0 : i64, scratch_operands = 0 : i64, tpu.core_type = #tpu.core_type<tc>, window_params = [{transform_indices = @transform_0, window_bounds = array<i64: 1, 16, 16, 128>}, {pipeline_mode = #tpu.pipeline_mode<synchronous>, transform_indices = @transform_1, window_bounds = array<i64: 128, 128>}, {transform_indices = @transform_2, window_bounds = array<i64: 1, 16, 16, 128>}, {transform_indices = @transform_3, window_bounds = array<i64: 1, 1, 2, 128>}]} {
    %c0 = arith.constant 0 : index
    %c0_0 = arith.constant 0 : index
    %c0_1 = arith.constant 0 : index
    %c0_2 = arith.constant 0 : index
    %0 = vector.load %arg2[%c0, %c0_0, %c0_1, %c0_2] : memref<1x16x16x128xf32, #tpu.memory_space<vmem>>, vector<1x16x16x128xf32>
    %1 = vector.shape_cast %0 : vector<1x16x16x128xf32> to vector<16x16x128xf32>
    %2 = vector.shape_cast %1 : vector<16x16x128xf32> to vector<256x128xf32>
    %c0_3 = arith.constant 0 : index
    %c0_4 = arith.constant 0 : index
    %3 = vector.load %arg3[%c0_3, %c0_4] : memref<128x128xf32, #tpu.memory_space<vmem>>, vector<128x128xf32>
    %cst = arith.constant dense<0.000000e+00> : vector<256x128xf32>
    %4 = tpu.matmul %2, %3, %cst {dimension_numbers = #tpu.dot_dimension_numbers<[1], [0], [0], [1], [0, 0, 1, 1], [], []>} : vector<256x128xf32>, vector<128x128xf32>, vector<256x128xf32> -> vector<256x128xf32>
    %5 = vector.shape_cast %4 : vector<256x128xf32> to vector<16x16x128xf32>
    %c0_5 = arith.constant 0 : index
    %c0_6 = arith.constant 0 : index
    %c0_7 = arith.constant 0 : index
    %c0_8 = arith.constant 0 : index
    %6 = vector.load %arg4[%c0_5, %c0_6, %c0_7, %c0_8] : memref<1x16x16x128xf32, #tpu.memory_space<vmem>>, vector<1x16x16x128xf32>
    %7 = vector.shape_cast %6 : vector<1x16x16x128xf32> to vector<16x16x128xf32>
    %8 = vector.shape_cast %5 : vector<16x16x128xf32> to vector<1x16x16x128xf32>
    tpu.vector_store %arg4[%c0_5, %c0_6, %c0_7, %c0_8], %8 {strides = array<i32>} : memref<1x16x16x128xf32, #tpu.memory_space<vmem>>, vector<1x16x16x128xf32>,
    %cst_9 = arith.constant dense<0.000000e+00> : vector<128xf32>
    %9 = vector.multi_reduction <add>, %4, %cst_9 [0] : vector<256x128xf32> to vector<128xf32>
    %10 = vector.shape_cast %9 : vector<128xf32> to vector<1x128xf32>
    %11 = arith.mulf %4, %4 : vector<256x128xf32>
    %cst_10 = arith.constant dense<0.000000e+00> : vector<128xf32>
    %12 = vector.multi_reduction <add>, %11, %cst_10 [0] : vector<256x128xf32> to vector<128xf32>
    %13 = vector.shape_cast %12 : vector<128xf32> to vector<1x128xf32>
    %14 = tpu.concatenate %10, %13 in 0 : vector<1x128xf32>, vector<1x128xf32> -> vector<2x128xf32>
    %c0_11 = arith.constant 0 : index
    %c0_12 = arith.constant 0 : index
    %c0_13 = arith.constant 0 : index
    %c0_14 = arith.constant 0 : index
    %15 = vector.load %arg5[%c0_11, %c0_12, %c0_13, %c0_14] : memref<1x1x2x128xf32, #tpu.memory_space<vmem>>, vector<1x1x2x128xf32>
    %16 = vector.shape_cast %15 : vector<1x1x2x128xf32> to vector<2x128xf32>
    %17 = vector.shape_cast %14 : vector<2x128xf32> to vector<1x1x2x128xf32>
    tpu.vector_store %arg5[%c0_11, %c0_12, %c0_13, %c0_14], %17 {strides = array<i32>} : memref<1x1x2x128xf32, #tpu.memory_space<vmem>>, vector<1x1x2x128xf32>,
    return
  }
  func.func @transform_0(%arg0: i32, %arg1: i32) -> (i32, i32, i32, i32) {
    %c0_i32 = arith.constant 0 : i32
    %c0_i32_0 = arith.constant 0 : i32
    %c0_i32_1 = arith.constant 0 : i32
    return %arg0, %arg1, %c0_i32, %c0_i32_0 : i32, i32, i32, i32
  }
  func.func @transform_1(%arg0: i32, %arg1: i32) -> (i32, i32) {
    %c0_i32 = arith.constant 0 : i32
    %c0_i32_0 = arith.constant 0 : i32
    %c0_i32_1 = arith.constant 0 : i32
    return %c0_i32, %c0_i32_0 : i32, i32
  }
  func.func @transform_2(%arg0: i32, %arg1: i32) -> (i32, i32, i32, i32) {
    %c0_i32 = arith.constant 0 : i32
    %c0_i32_0 = arith.constant 0 : i32
    %c0_i32_1 = arith.constant 0 : i32
    return %arg0, %arg1, %c0_i32, %c0_i32_0 : i32, i32, i32, i32
  }
  func.func @transform_3(%arg0: i32, %arg1: i32) -> (i32, i32, i32, i32) {
    %c0_i32 = arith.constant 0 : i32
    %c0_i32_0 = arith.constant 0 : i32
    %c0_i32_1 = arith.constant 0 : i32
    return %arg0, %arg1, %c0_i32, %c0_i32_0 : i32, i32, i32, i32
  }
}

</mosaic_0001>

<llo_original>
// kernel: tpu_custom_call.1
$region0: #{tpu_custom_call.1}
  #allocation0 [shape = 'u32[]', space=smem, size = 0x4, offset = 0x4, fixed_abs, tag = 'smem constant byte address 0x4 - core index']
  #allocation1 [shape = 'u32[144,128]{1,0:T(1,128)}', space=vmem, size = 0x12000, scoped, tag = 'internal scratch']
  %s0 = inlined_call_operand.hbm [shape: f32[2,16,16,128], index: 0, kind: input, shape index: {}]
  %s1 = inlined_call_operand.hbm [shape: f32[128,128], index: 1, kind: input, shape index: {}]
  %s2 = inlined_call_operand.hbm [shape: f32[2,16,16,128], index: 2, kind: output, shape index: {0}]
  %s3 = inlined_call_operand.hbm [shape: f32[2,1,2,128], index: 3, kind: output, shape index: {1}]
  %4 = xla_tuple %s2, %s3
  %s5 = sld [smem:[#allocation0]]
  $region57: #{tpu_custom_call.1} parent=0
    _
  %s7 = ssub.s32 1, %s5
  %s8 = scalar_select 0, %s7, %s5
  $region1: #{tpu_custom_call.1} parent=0
    #allocation2 [shape = 'u8[262144]{0}', space=vmem, size = 0x40000, scoped, tag = 'input window, operand 0']
    #allocation3 [shape = 's32[2]{0}', space=sflag, size = 0x8, scoped, tag = 'scoped memory for tpu_custom_call.1']
    #allocation4 [shape = 's32[2]{0}', space=sflag, size = 0x8, scoped, tag = 'scoped memory for tpu_custom_call.1']
    #allocation5 [shape = 'u8[65536]{0}', space=vmem, size = 0x10000, scoped, tag = 'input window, operand 1, single buffered']
    #allocation6 [shape = 's32[1]{0}', space=sflag, size = 0x4, scoped, tag = 'scoped memory for tpu_custom_call.1']
    #allocation7 [shape = 'u8[262144]{0}', space=vmem, size = 0x40000, scoped, tag = 'output window, operand 0']
    #allocation8 [shape = 'u8[2048]{0}', space=vmem, size = 0x800, scoped, tag = 'output window, operand 1']
    #allocation9 [shape = 's32[2]{0}', space=sflag, size = 0x8, scoped, tag = 'scoped memory for tpu_custom_call.1']
    %9 = vsyncpa [#allocation3], 0
    %s10 = scalar_lea.sflag [#allocation3], 1
    %11 = vsyncpa %s10, 0
    %12 = vsyncpa [#allocation6], 0
    %13 = vsyncpa [#allocation4], 0
    %s14 = scalar_lea.sflag [#allocation4], 1
    %15 = vsyncpa %s14, 0
    %16 = vsyncpa [#allocation9], 0
    %s17 = scalar_lea.sflag [#allocation9], 1
    %18 = vsyncpa %s17, 0
    loop: start=0, step=1, limit=4
    $region2: #{tpu_custom_call.1} parent=1 // loop_pre_header
      _
    $region3: #{tpu_custom_call.1} parent=1 // loop_header
      %s20 = sphi 0, %s24
      %p21 = scmp.ge.s32.totalorder %s20, 4
      %s27 = sphi 0, %s39
      %s28 = sphi 0, %s35
      %s29 = sphi 0, %s27
      %s30 = sphi 0, %s28
      %s31 = sphi 0, %s29
      %s32 = sphi 0, %s30
      %s44 = sphi 0, %s46
      %s47 = sphi 0, %s44
      %s48 = sphi 0, %s47
      %s64 = sphi 0, %s48
      %s68 = sphi 0, %s68
      %s70 = sphi 0, %s68
      %s71 = sphi 0, %s70
      %s85 = sphi 0, %s71
      %s93 = sphi 0, %s95
      %s96 = sphi 0, %s93
      %s97 = sphi 0, %s96
      %s113 = sphi 0, %s97
      %s121 = sphi 0, %s123
      %s124 = sphi 0, %s121
      %s125 = sphi 0, %s124
      %s141 = sphi 0, %s125
    $region4: #{tpu_custom_call.1} parent=1 // loop_header_branch
      %23 = sbr.rel (%p21) target = $region8
    $region5: #{tpu_custom_call.1} parent=1 // loop_body
      %s25 = ssub.s32 %s20, 1
      %s26 = ssub.s32 %s20, 2
      %s33 = sadd.s32 1, %s28
      %p34 = scmp.ge.s32.totalorder %s33, 1
      %s35 = scalar_select %p34, 0, %s33
      %s36 = sadd.s32 1, %s27
      %s37 = scalar_select %p34, %s36, %s27
      %p38 = scmp.ge.s32.totalorder %s37, 2
      %s39 = scalar_select %p38, 0, %s37
      %s40 = ssub.s32 %s27, %s39
      %s41 = ssub.s32 %s28, %s35
      %s42 = sor.u32 %s40, %s41
      %p43 = scmp.eq.s32.totalorder %s42, 0
      %s45 = sadd.s32 %s44, 1
      %s46 = scalar_select %p43, %s44, %s45
      %p49 = pneg %p43
      %p50 = scmp.eq.s32.totalorder %s20, 1
      %p51 = por %p49, %p50
      %p52 = scmp.ne.s32.totalorder %s44, %s47
      %p53 = scmp.eq.s32.totalorder %s20, 0
      %p54 = por %p52, %p53
      %p55 = scmp.ne.s32.totalorder %s44, %s47
      %p56 = scmp.eq.s32.totalorder %s25, 1
      %p57 = por %p55, %p56
      %p58 = scmp.ne.s32.totalorder %s47, %s48
      %p59 = scmp.eq.s32.totalorder %s25, 0
      %p60 = por %p58, %p59
      %p61 = scmp.ne.s32.totalorder %s47, %s48
      %p62 = scmp.eq.s32.totalorder %s26, 1
      %p63 = por %p61, %p62
      %p65 = scmp.ne.s32.totalorder %s48, %s64
      %p66 = scmp.eq.s32.totalorder %s26, 0
      %p67 = por %p65, %p66
      %s69 = sadd.s32 %s68, 1
      %p72 = scmp.eq.s32.totalorder %s20, 1
      %p73 = scmp.ne.s32.totalorder %s68, %s70
      %p74 = scmp.eq.s32.totalorder %s20, 0
      %p75 = por %p73, %p74
      %p76 = scmp.ne.s32.totalorder %s68, %s70
      %p77 = scmp.eq.s32.totalorder %s25, 1
      %p78 = por %p76, %p77
      %p79 = scmp.ne.s32.totalorder %s70, %s71
      %p80 = scmp.eq.s32.totalorder %s25, 0
      %p81 = por %p79, %p80
      %p82 = scmp.ne.s32.totalorder %s70, %s71
      %p83 = scmp.eq.s32.totalorder %s26, 1
      %p84 = por %p82, %p83
      %p86 = scmp.ne.s32.totalorder %s71, %s85
      %p87 = scmp.eq.s32.totalorder %s26, 0
      %p88 = por %p86, %p87
      %s89 = ssub.s32 %s27, %s39
      %s90 = ssub.s32 %s28, %s35
      %s91 = sor.u32 %s89, %s90
      %p92 = scmp.eq.s32.totalorder %s91, 0
      %s94 = sadd.s32 %s93, 1
      %s95 = scalar_select %p92, %s93, %s94
      %p98 = pneg %p92
      %p99 = scmp.eq.s32.totalorder %s20, 1
      %p100 = por %p98, %p99
      %p101 = scmp.ne.s32.totalorder %s93, %s96
      %p102 = scmp.eq.s32.totalorder %s20, 0
      %p103 = por %p101, %p102
      %p104 = scmp.ne.s32.totalorder %s93, %s96
      %p105 = scmp.eq.s32.totalorder %s25, 1
      %p106 = por %p104, %p105
      %p107 = scmp.ne.s32.totalorder %s96, %s97
      %p108 = scmp.eq.s32.totalorder %s25, 0
      %p109 = por %p107, %p108
      %p110 = scmp.ne.s32.totalorder %s96, %s97
      %p111 = scmp.eq.s32.totalorder %s26, 1
      %p112 = por %p110, %p111
      %p114 = scmp.ne.s32.totalorder %s97, %s113
      %p115 = scmp.eq.s32.totalorder %s26, 0
      %p116 = por %p114, %p115
      %s117 = ssub.s32 %s27, %s39
      %s118 = ssub.s32 %s28, %s35
      %s119 = sor.u32 %s117, %s118
      %p120 = scmp.eq.s32.totalorder %s119, 0
      %s122 = sadd.s32 %s121, 1
      %s123 = scalar_select %p120, %s121, %s122
      %p126 = pneg %p120
      %p127 = scmp.eq.s32.totalorder %s20, 1
      %p128 = por %p126, %p127
      %p129 = scmp.ne.s32.totalorder %s121, %s124
      %p130 = scmp.eq.s32.totalorder %s20, 0
      %p131 = por %p129, %p130
      %p132 = scmp.ne.s32.totalorder %s121, %s124
      %p133 = scmp.eq.s32.totalorder %s25, 1
      %p134 = por %p132, %p133
      %p135 = scmp.ne.s32.totalorder %s124, %s125
      %p136 = scmp.eq.s32.totalorder %s25, 0
      %p137 = por %p135, %p136
      %p138 = scmp.ne.s32.totalorder %s124, %s125
      %p139 = scmp.eq.s32.totalorder %s26, 1
      %p140 = por %p138, %p139
      %p142 = scmp.ne.s32.totalorder %s125, %s141
      %p143 = scmp.eq.s32.totalorder %s26, 0
      %p144 = por %p142, %p143
      %p145 = scmp.le.s32.totalorder 1, %s20
      %p146 = scmp.lt.s32.totalorder %s20, 3
      %p147 = pnand %p145, %p146
      %p148 = pneg %p147
      // Predicated region
      $region9: #{tpu_custom_call.1} parent=5 // pred_check
        _
      $region10: #{tpu_custom_call.1} parent=5 // pred_check_branch
        %150 = sbr.rel (%p147) target = $region12
      $region11: #{tpu_custom_call.1} parent=5 // pred_region
        %s151 = ssub.s32 %s20, 1
        // Predicated region
        $region13: #{tpu_custom_call.1} parent=11 // pred_check
          %p152 = pneg %p81
        $region14: #{tpu_custom_call.1} parent=11 // pred_check_branch
          %154 = sbr.rel (%p152) target = $region16
        $region15: #{tpu_custom_call.1} parent=11 // pred_region
          %s156 = ssub.s32 2048, 2048
          %157 = vsyncadd [#allocation6], %s156
          %s158 = sshll.u32 [#allocation5], 4
          %s159 = int_to_ptr.vmem [resolvable:$true] %s158
          %164 = dma.hbm_to_vmem [thread:$0]  %s1, 2048, %s159, [#allocation6], 128, 128, 8
        $region16: #{tpu_custom_call.1} parent=11 // pred_fallthru
          _
      $region12: #{tpu_custom_call.1} parent=5 // pred_fallthru
        _
      %p165 = scmp.lt.s32.totalorder %s20, 2
      // Predicated region
      $region17: #{tpu_custom_call.1} parent=5 // pred_check
        %p166 = pneg %p165
      $region18: #{tpu_custom_call.1} parent=5 // pred_check_branch
        %168 = sbr.rel (%p166) target = $region20
      $region19: #{tpu_custom_call.1} parent=5 // pred_region
        // Predicated region
        $region21: #{tpu_custom_call.1} parent=19 // pred_check
          %p169 = pneg %p54
        $region22: #{tpu_custom_call.1} parent=19 // pred_check_branch
          %171 = sbr.rel (%p169) target = $region24
        $region23: #{tpu_custom_call.1} parent=19 // pred_region
          %s172 = sand.u32 %s44, 1
          %s173 = scalar_lea.sflag [#allocation3], %s172
          %s174 = sand.u32 %s44, 1
          %s175 = smul.addr %s174, 256
          %s176 = scalar_lea.vmem [#allocation2], %s175
          %s177 = smul.u32 16, %s28
          %s179 = ssub.s32 4096, 4096
          %180 = vsyncadd %s173, %s179
          %s181 = smul.addr %s177, 2
          %s182 = smul.addr %s27, 32
          %s183 = sadd.s32 %s181, %s182
          %s184 = smul.addr %s183, 128
          %s185 = scalar_lea.hbm %s0, %s184
          %s186 = sshll.u32 %s176, 4
          %s187 = int_to_ptr.vmem [resolvable:$true] %s186
          %192 = dma.hbm_to_vmem [thread:$0]  %s185, 4096, %s187, %s173, 128, 128, 8
        $region24: #{tpu_custom_call.1} parent=19 // pred_fallthru
          _
      $region20: #{tpu_custom_call.1} parent=5 // pred_fallthru
        _
      %p193 = scmp.le.s32.totalorder 1, %s20
      %p194 = scmp.lt.s32.totalorder %s20, 3
      %p195 = pnand %p193, %p194
      %p196 = pneg %p195
      // Predicated region
      $region25: #{tpu_custom_call.1} parent=5 // pred_check
        _
      $region26: #{tpu_custom_call.1} parent=5 // pred_check_branch
        %198 = sbr.rel (%p195) target = $region28
      $region27: #{tpu_custom_call.1} parent=5 // pred_region
        %s199 = ssub.s32 %s20, 1
        %s200 = sand.u32 %s47, 1
        %s201 = scalar_lea.sflag [#allocation3], %s200
        %s202 = sand.u32 %s47, 1
        %s203 = smul.addr %s202, 256
        %s204 = scalar_lea.vmem [#allocation2], %s203
        // Predicated region
        $region29: #{tpu_custom_call.1} parent=27 // pred_check
          %p205 = pneg %p60
        $region30: #{tpu_custom_call.1} parent=27 // pred_check_branch
          %207 = sbr.rel (%p205) target = $region32
        $region31: #{tpu_custom_call.1} parent=27 // pred_region
          %208 = dma.done %s201, 4096
        $region32: #{tpu_custom_call.1} parent=27 // pred_fallthru
          _
        // Predicated region
        $region33: #{tpu_custom_call.1} parent=27 // pred_check
          %p209 = pneg %p81
        $region34: #{tpu_custom_call.1} parent=27 // pred_check_branch
          %211 = sbr.rel (%p209) target = $region36
        $region35: #{tpu_custom_call.1} parent=27 // pred_region
          %212 = dma.done [#allocation6], 2048
        $region36: #{tpu_custom_call.1} parent=27 // pred_fallthru
          _
        %s213 = sand.u32 %s47, 1
        %s214 = scalar_lea.sflag [#allocation3], %s213
        %s215 = sand.u32 %s47, 1
        %s216 = smul.addr %s215, 256
        %s217 = scalar_lea.vmem [#allocation2], %s216
        %p218 = pneg %p60
        %p219 = pneg %p57
        %p220 = pneg %p81
        %p221 = pneg %p78
        %p222 = pneg %p109
        %p223 = pneg %p106
        %s224 = sand.u32 %s96, 1
        %s225 = scalar_lea.sflag [#allocation4], %s224
        %s226 = sand.u32 %s96, 1
        %s227 = smul.addr %s226, 256
        %s228 = scalar_lea.vmem [#allocation7], %s227
        %p229 = pneg %p137
        %p230 = pneg %p134
        %s231 = sand.u32 %s124, 1
        %s232 = scalar_lea.sflag [#allocation9], %s231
        %s233 = sand.u32 %s124, 1
        %s234 = smul.addr %s233, 2
        %s235 = scalar_lea.vmem [#allocation8], %s234
        %s236 = smul.u32 16, %s30
        %s237 = smul.u32 16, %s30
        %v238 = vld [vmem:[%s204] sm:$0xff]
        %v239 = vld [vmem:[%s204 + $0x8] sm:$0xff]
        %v240 = vld [vmem:[%s204 + $0x10] sm:$0xff]
        %v241 = vld [vmem:[%s204 + $0x18] sm:$0xff]
        %v242 = vld [vmem:[%s204 + $0x20] sm:$0xff]
        %v243 = vld [vmem:[%s204 + $0x28] sm:$0xff]
        %v244 = vld [vmem:[%s204 + $0x30] sm:$0xff]
        %v245 = vld [vmem:[%s204 + $0x38] sm:$0xff]
        %v246 = vld [vmem:[%s204 + $0x40] sm:$0xff]
        %v247 = vld [vmem:[%s204 + $0x48] sm:$0xff]
        %v248 = vld [vmem:[%s204 + $0x50] sm:$0xff]
        %v249 = vld [vmem:[%s204 + $0x58] sm:$0xff]
        %v250 = vld [vmem:[%s204 + $0x60] sm:$0xff]
        %v251 = vld [vmem:[%s204 + $0x68] sm:$0xff]
        %v252 = vld [vmem:[%s204 + $0x70] sm:$0xff]
        %v253 = vld [vmem:[%s204 + $0x78] sm:$0xff]
        %v254 = vld [vmem:[%s204 + $0x80] sm:$0xff]
        %v255 = vld [vmem:[%s204 + $0x88] sm:$0xff]
        %v256 = vld [vmem:[%s204 + $0x90] sm:$0xff]
        %v257 = vld [vmem:[%s204 + $0x98] sm:$0xff]
        %v258 = vld [vmem:[%s204 + $0xa0] sm:$0xff]
        %v259 = vld [vmem:[%s204 + $0xa8] sm:$0xff]
        %v260 = vld [vmem:[%s204 + $0xb0] sm:$0xff]
        %v261 = vld [vmem:[%s204 + $0xb8] sm:$0xff]
        %v262 = vld [vmem:[%s204 + $0xc0] sm:$0xff]
        %v263 = vld [vmem:[%s204 + $0xc8] sm:$0xff]
        %v264 = vld [vmem:[%s204 + $0xd0] sm:$0xff]
        %v265 = vld [vmem:[%s204 + $0xd8] sm:$0xff]
        %v266 = vld [vmem:[%s204 + $0xe0] sm:$0xff]
        %v267 = vld [vmem:[%s204 + $0xe8] sm:$0xff]
        %v268 = vld [vmem:[%s204 + $0xf0] sm:$0xff]
        %v269 = vld [vmem:[%s204 + $0xf8] sm:$0xff]
        %v270 = vld [vmem:[#allocation5] sm:$0xff]
        %v271 = vld [vmem:[#allocation5 + $0x8] sm:$0xff]
        %v272 = vld [vmem:[#allocation5 + $0x10] sm:$0xff]
        %v273 = vld [vmem:[#allocation5 + $0x18] sm:$0xff]
        %v274 = vld [vmem:[#allocation5 + $0x20] sm:$0xff]
        %v275 = vld [vmem:[#allocation5 + $0x28] sm:$0xff]
        %v276 = vld [vmem:[#allocation5 + $0x30] sm:$0xff]
        %v277 = vld [vmem:[#allocation5 + $0x38] sm:$0xff]
        %v278 = vld [vmem:[#allocation5 + $0x40] sm:$0xff]
        %v279 = vld [vmem:[#allocation5 + $0x48] sm:$0xff]
        %v280 = vld [vmem:[#allocation5 + $0x50] sm:$0xff]
        %v281 = vld [vmem:[#allocation5 + $0x58] sm:$0xff]
        %v282 = vld [vmem:[#allocation5 + $0x60] sm:$0xff]
        %v283 = vld [vmem:[#allocation5 + $0x68] sm:$0xff]
        %v284 = vld [vmem:[#allocation5 + $0x70] sm:$0xff]
        %v285 = vld [vmem:[#allocation5 + $0x78] sm:$0xff]
        %286 = vmatprep.subr.mxu0 0.0
        %287 = vmatpush1.msra.mxu0 %v270
        %288 = vmatprep.subr.mxu0 0.0
        %289 = vmatpush1.msra.mxu0 %v271
        %290 = vmatprep.subr.mxu0 0.0
        %291 = vmatpush1.msra.mxu0 %v272
        %292 = vmatprep.subr.mxu0 0.0
        %293 = vmatpush1.msra.mxu0 %v273
        %294 = vmatprep.subr.mxu0 0.0
        %295 = vmatpush1.msra.mxu0 %v274
        %296 = vmatprep.subr.mxu0 0.0
        %297 = vmatpush1.msra.mxu0 %v275
        %298 = vmatprep.subr.mxu0 0.0
        %299 = vmatpush1.msra.mxu0 %v276
        %300 = vmatprep.subr.mxu0 0.0
        %301 = vmatpush1.msra.mxu0 %v277
        %302 = vmatprep.subr.mxu0 0.0
        %303 = vmatpush1.msra.mxu0 %v278
        %304 = vmatprep.subr.mxu0 0.0
        %305 = vmatpush1.msra.mxu0 %v279
        %306 = vmatprep.subr.mxu0 0.0
        %307 = vmatpush1.msra.mxu0 %v280
        %308 = vmatprep.subr.mxu0 0.0
        %309 = vmatpush1.msra.mxu0 %v281
        %310 = vmatprep.subr.mxu0 0.0
        %311 = vmatpush1.msra.mxu0 %v282
        %312 = vmatprep.subr.mxu0 0.0
        %313 = vmatpush1.msra.mxu0 %v283
        %314 = vmatprep.subr.mxu0 0.0
        %315 = vmatpush1.msra.mxu0 %v284
        %316 = vmatprep.subr.mxu0 0.0
        %317 = vmatpush1.msra.mxu0 %v285
        %318 = vmatprep.subr.mxu0 0.0
        %319 = vmatpush1.msra.mxu0 0.0
        %320 = vmatprep.subr.mxu0 0.0
        %321 = vmatpush1.msra.mxu0 0.0
        %322 = vmatprep.subr.mxu0 0.0
        %323 = vmatpush1.msra.mxu0 0.0
        %324 = vmatprep.subr.mxu0 0.0
        %325 = vmatpush1.msra.mxu0 0.0
        %326 = vmatprep.subr.mxu0 0.0
        %327 = vmatpush1.msra.mxu0 0.0
        %328 = vmatprep.subr.mxu0 0.0
        %329 = vmatpush1.msra.mxu0 0.0
        %330 = vmatprep.subr.mxu0 0.0
        %331 = vmatpush1.msra.mxu0 0.0
        %332 = vmatprep.subr.mxu0 0.0
        %333 = vmatpush1.msra.mxu0 0.0
        %334 = vmatprep.subr.mxu0 0.0
        %335 = vmatpush1.msra.mxu0 0.0
        %336 = vmatprep.subr.mxu0 0.0
        %337 = vmatpush1.msra.mxu0 0.0
        %338 = vmatprep.subr.mxu0 0.0
        %339 = vmatpush1.msra.mxu0 0.0
        %340 = vmatprep.subr.mxu0 0.0
        %341 = vmatpush1.msra.mxu0 0.0
        %342 = vmatprep.subr.mxu0 0.0
        %343 = vmatpush1.msra.mxu0 0.0
        %344 = vmatprep.subr.mxu0 0.0
        %345 = vmatpush1.msra.mxu0 0.0
        %346 = vmatprep.subr.mxu0 0.0
        %347 = vmatpush1.msra.mxu0 0.0
        %348 = vmatprep.subr.mxu0 0.0
        %349 = vmatpush1.msra.mxu0 0.0
        %350 = vmatprep.mubr.f32.mxu0 0.0
        %351 = vmatmul.mubr.f32.gmra.mrb[0].mxu0 %v238
        %v352 = vpop.f32.mrb[0].mxu0
        %v353 = vadd.f32 0.0, %v352
        %v354 = vpop.f32.mrb[0].mxu0
        %355 = vmatprep.mubr.f32.mxu0 0.0
        %356 = vmatmul.mubr.f32.gmra.mrb[0].mxu0 %v239
        %v357 = vpop.f32.mrb[0].mxu0
        %v358 = vadd.f32 0.0, %v357
        %v359 = vpop.f32.mrb[0].mxu0
        %360 = vmatprep.mubr.f32.mxu0 0.0
        %361 = vmatmul.mubr.f32.gmra.mrb[0].mxu0 %v240
        %v362 = vpop.f32.mrb[0].mxu0
        %v363 = vadd.f32 0.0, %v362
        %v364 = vpop.f32.mrb[0].mxu0
        %365 = vmatprep.mubr.f32.mxu0 0.0
        %366 = vmatmul.mubr.f32.gmra.mrb[0].mxu0 %v241
        %v367 = vpop.f32.mrb[0].mxu0
        %v368 = vadd.f32 0.0, %v367
        %v369 = vpop.f32.mrb[0].mxu0
        %370 = vmatprep.mubr.f32.mxu0 0.0
        %371 = vmatmul.mubr.f32.gmra.mrb[0].mxu0 %v242
        %v372 = vpop.f32.mrb[0].mxu0
        %v373 = vadd.f32 0.0, %v372
        %v374 = vpop.f32.mrb[0].mxu0
        %375 = vmatprep.mubr.f32.mxu0 0.0
        %376 = vmatmul.mubr.f32.gmra.mrb[0].mxu0 %v243
        %v377 = vpop.f32.mrb[0].mxu0
        %v378 = vadd.f32 0.0, %v377
        %v379 = vpop.f32.mrb[0].mxu0
        %380 = vmatprep.mubr.f32.mxu0 0.0
        %381 = vmatmul.mubr.f32.gmra.mrb[0].mxu0 %v244
        %v382 = vpop.f32.mrb[0].mxu0
        %v383 = vadd.f32 0.0, %v382
        %v384 = vpop.f32.mrb[0].mxu0
        %385 = vmatprep.mubr.f32.mxu0 0.0
        %386 = vmatmul.mubr.f32.gmra.mrb[0].mxu0 %v245
        %v387 = vpop.f32.mrb[0].mxu0
        %v388 = vadd.f32 0.0, %v387
        %v389 = vpop.f32.mrb[0].mxu0
        %390 = vmatprep.mubr.f32.mxu0 0.0
        %391 = vmatmul.mubr.f32.gmra.mrb[0].mxu0 %v246
        %v392 = vpop.f32.mrb[0].mxu0
        %v393 = vadd.f32 0.0, %v392
        %v394 = vpop.f32.mrb[0].mxu0
        %395 = vmatprep.mubr.f32.mxu0 0.0
        %396 = vmatmul.mubr.f32.gmra.mrb[0].mxu0 %v247
        %v397 = vpop.f32.mrb[0].mxu0
        %v398 = vadd.f32 0.0, %v397
        %v399 = vpop.f32.mrb[0].mxu0
        %400 = vmatprep.mubr.f32.mxu0 0.0
        %401 = vmatmul.mubr.f32.gmra.mrb[0].mxu0 %v248
        %v402 = vpop.f32.mrb[0].mxu0
        %v403 = vadd.f32 0.0, %v402
        %v404 = vpop.f32.mrb[0].mxu0
        %405 = vmatprep.mubr.f32.mxu0 0.0
        %406 = vmatmul.mubr.f32.gmra.mrb[0].mxu0 %v249
        %v407 = vpop.f32.mrb[0].mxu0
        %v408 = vadd.f32 0.0, %v407
        %v409 = vpop.f32.mrb[0].mxu0
        %410 = vmatprep.mubr.f32.mxu0 0.0
        %411 = vmatmul.mubr.f32.gmra.mrb[0].mxu0 %v250
        %v412 = vpop.f32.mrb[0].mxu0
        %v413 = vadd.f32 0.0, %v412
        %v414 = vpop.f32.mrb[0].mxu0
        %415 = vmatprep.mubr.f32.mxu0 0.0
        %416 = vmatmul.mubr.f32.gmra.mrb[0].mxu0 %v251
        %v417 = vpop.f32.mrb[0].mxu0
        %v418 = vadd.f32 0.0, %v417
        %v419 = vpop.f32.mrb[0].mxu0
        %420 = vmatprep.mubr.f32.mxu0 0.0
        %421 = vmatmul.mubr.f32.gmra.mrb[0].mxu0 %v252
        %v422 = vpop.f32.mrb[0].mxu0
        %v423 = vadd.f32 0.0, %v422
        %v424 = vpop.f32.mrb[0].mxu0
        %425 = vmatprep.mubr.f32.mxu0 0.0
        %426 = vmatmul.mubr.f32.gmra.mrb[0].mxu0 %v253
        %v427 = vpop.f32.mrb[0].mxu0
        %v428 = vadd.f32 0.0, %v427
        %v429 = vpop.f32.mrb[0].mxu0
        %430 = vmatprep.mubr.f32.mxu0 0.0
        %431 = vmatmul.mubr.f32.gmra.mrb[0].mxu0 %v254
        %v432 = vpop.f32.mrb[0].mxu0
        %v433 = vadd.f32 0.0, %v432
        %v434 = vpop.f32.mrb[0].mxu0
        %435 = vmatprep.mubr.f32.mxu0 0.0
        %436 = vmatmul.mubr.f32.gmra.mrb[0].mxu0 %v255
        %v437 = vpop.f32.mrb[0].mxu0
        %v438 = vadd.f32 0.0, %v437
        %v439 = vpop.f32.mrb[0].mxu0
        %440 = vmatprep.mubr.f32.mxu0 0.0
        %441 = vmatmul.mubr.f32.gmra.mrb[0].mxu0 %v256
        %v442 = vpop.f32.mrb[0].mxu0
        %v443 = vadd.f32 0.0, %v442
        %v444 = vpop.f32.mrb[0].mxu0
        %445 = vmatprep.mubr.f32.mxu0 0.0
        %446 = vmatmul.mubr.f32.gmra.mrb[0].mxu0 %v257
        %v447 = vpop.f32.mrb[0].mxu0
        %v448 = vadd.f32 0.0, %v447
        %v449 = vpop.f32.mrb[0].mxu0
        %450 = vmatprep.mubr.f32.mxu0 0.0
        %451 = vmatmul.mubr.f32.gmra.mrb[0].mxu0 %v258
        %v452 = vpop.f32.mrb[0].mxu0
        %v453 = vadd.f32 0.0, %v452
        %v454 = vpop.f32.mrb[0].mxu0
        %455 = vmatprep.mubr.f32.mxu0 0.0
        %456 = vmatmul.mubr.f32.gmra.mrb[0].mxu0 %v259
        %v457 = vpop.f32.mrb[0].mxu0
        %v458 = vadd.f32 0.0, %v457
        %v459 = vpop.f32.mrb[0].mxu0
        %460 = vmatprep.mubr.f32.mxu0 0.0
        %461 = vmatmul.mubr.f32.gmra.mrb[0].mxu0 %v260
        %v462 = vpop.f32.mrb[0].mxu0
        %v463 = vadd.f32 0.0, %v462
        %v464 = vpop.f32.mrb[0].mxu0
        %465 = vmatprep.mubr.f32.mxu0 0.0
        %466 = vmatmul.mubr.f32.gmra.mrb[0].mxu0 %v261
        %v467 = vpop.f32.mrb[0].mxu0
        %v468 = vadd.f32 0.0, %v467
        %v469 = vpop.f32.mrb[0].mxu0
        %470 = vmatprep.mubr.f32.mxu0 0.0
        %471 = vmatmul.mubr.f32.gmra.mrb[0].mxu0 %v262
        %v472 = vpop.f32.mrb[0].mxu0
        %v473 = vadd.f32 0.0, %v472
        %v474 = vpop.f32.mrb[0].mxu0
        %475 = vmatprep.mubr.f32.mxu0 0.0
        %476 = vmatmul.mubr.f32.gmra.mrb[0].mxu0 %v263
        %v477 = vpop.f32.mrb[0].mxu0
        %v478 = vadd.f32 0.0, %v477
        %v479 = vpop.f32.mrb[0].mxu0
        %480 = vmatprep.mubr.f32.mxu0 0.0
        %481 = vmatmul.mubr.f32.gmra.mrb[0].mxu0 %v264
        %v482 = vpop.f32.mrb[0].mxu0
        %v483 = vadd.f32 0.0, %v482
        %v484 = vpop.f32.mrb[0].mxu0
        %485 = vmatprep.mubr.f32.mxu0 0.0
        %486 = vmatmul.mubr.f32.gmra.mrb[0].mxu0 %v265
        %v487 = vpop.f32.mrb[0].mxu0
        %v488 = vadd.f32 0.0, %v487
        %v489 = vpop.f32.mrb[0].mxu0
        %490 = vmatprep.mubr.f32.mxu0 0.0
        %491 = vmatmul.mubr.f32.gmra.mrb[0].mxu0 %v266
        %v492 = vpop.f32.mrb[0].mxu0
        %v493 = vadd.f32 0.0, %v492
        %v494 = vpop.f32.mrb[0].mxu0
        %495 = vmatprep.mubr.f32.mxu0 0.0
        %496 = vmatmul.mubr.f32.gmra.mrb[0].mxu0 %v267
        %v497 = vpop.f32.mrb[0].mxu0
        %v498 = vadd.f32 0.0, %v497
        %v499 = vpop.f32.mrb[0].mxu0
        %500 = vmatprep.mubr.f32.mxu0 0.0
        %501 = vmatmul.mubr.f32.gmra.mrb[0].mxu0 %v268
        %v502 = vpop.f32.mrb[0].mxu0
        %v503 = vadd.f32 0.0, %v502
        %v504 = vpop.f32.mrb[0].mxu0
        %505 = vmatprep.mubr.f32.mxu0 0.0
        %506 = vmatmul.mubr.f32.gmra.mrb[0].mxu0 %v269
        %v507 = vpop.f32.mrb[0].mxu0
        %v508 = vadd.f32 0.0, %v507
        %v509 = vpop.f32.mrb[0].mxu0
        %510 = vdwg.mxu0
        %511 = vst [vmem:[%s228] sm:$0xff] %v353
        %512 = vst [vmem:[%s228 + $0x8] sm:$0xff] %v358
        %513 = vst [vmem:[%s228 + $0x10] sm:$0xff] %v363
        %514 = vst [vmem:[%s228 + $0x18] sm:$0xff] %v368
        %515 = vst [vmem:[%s228 + $0x20] sm:$0xff] %v373
        %516 = vst [vmem:[%s228 + $0x28] sm:$0xff] %v378
        %517 = vst [vmem:[%s228 + $0x30] sm:$0xff] %v383
        %518 = vst [vmem:[%s228 + $0x38] sm:$0xff] %v388
        %519 = vst [vmem:[%s228 + $0x40] sm:$0xff] %v393
        %520 = vst [vmem:[%s228 + $0x48] sm:$0xff] %v398
        %521 = vst [vmem:[%s228 + $0x50] sm:$0xff] %v403
        %522 = vst [vmem:[%s228 + $0x58] sm:$0xff] %v408
        %523 = vst [vmem:[%s228 + $0x60] sm:$0xff] %v413
        %524 = vst [vmem:[%s228 + $0x68] sm:$0xff] %v418
        %525 = vst [vmem:[%s228 + $0x70] sm:$0xff] %v423
        %526 = vst [vmem:[%s228 + $0x78] sm:$0xff] %v428
        %527 = vst [vmem:[%s228 + $0x80] sm:$0xff] %v433
        %528 = vst [vmem:[%s228 + $0x88] sm:$0xff] %v438
        %529 = vst [vmem:[%s228 + $0x90] sm:$0xff] %v443
        %530 = vst [vmem:[%s228 + $0x98] sm:$0xff] %v448
        %531 = vst [vmem:[%s228 + $0xa0] sm:$0xff] %v453
        %532 = vst [vmem:[%s228 + $0xa8] sm:$0xff] %v458
        %533 = vst [vmem:[%s228 + $0xb0] sm:$0xff] %v463
        %534 = vst [vmem:[%s228 + $0xb8] sm:$0xff] %v468
        %535 = vst [vmem:[%s228 + $0xc0] sm:$0xff] %v473
        %536 = vst [vmem:[%s228 + $0xc8] sm:$0xff] %v478
        %537 = vst [vmem:[%s228 + $0xd0] sm:$0xff] %v483
        %538 = vst [vmem:[%s228 + $0xd8] sm:$0xff] %v488
        %539 = vst [vmem:[%s228 + $0xe0] sm:$0xff] %v493
        %540 = vst [vmem:[%s228 + $0xe8] sm:$0xff] %v498
        %541 = vst [vmem:[%s228 + $0xf0] sm:$0xff] %v503
        %542 = vst [vmem:[%s228 + $0xf8] sm:$0xff] %v508
        %v543 = vadd.f32 %v353, %v358
        %v544 = vadd.f32 %v543, %v363
        %v545 = vadd.f32 %v544, %v368
        %v546 = vadd.f32 %v545, %v373
        %v547 = vadd.f32 %v546, %v378
        %v548 = vadd.f32 %v547, %v383
        %v549 = vadd.f32 %v548, %v388
        %v550 = vadd.f32 %v549, %v393
        %v551 = vadd.f32 %v550, %v398
        %v552 = vadd.f32 %v551, %v403
        %v553 = vadd.f32 %v552, %v408
        %v554 = vadd.f32 %v553, %v413
        %v555 = vadd.f32 %v554, %v418
        %v556 = vadd.f32 %v555, %v423
        %v557 = vadd.f32 %v556, %v428
        %v558 = vadd.f32 %v557, %v433
        %v559 = vadd.f32 %v558, %v438
        %v560 = vadd.f32 %v559, %v443
        %v561 = vadd.f32 %v560, %v448
        %v562 = vadd.f32 %v561, %v453
        %v563 = vadd.f32 %v562, %v458
        %v564 = vadd.f32 %v563, %v463
        %v565 = vadd.f32 %v564, %v468
        %v566 = vadd.f32 %v565, %v473
        %v567 = vadd.f32 %v566, %v478
        %v568 = vadd.f32 %v567, %v483
        %v569 = vadd.f32 %v568, %v488
        %v570 = vadd.f32 %v569, %v493
        %v571 = vadd.f32 %v570, %v498
        %v572 = vadd.f32 %v571, %v503
        %v573 = vadd.f32 %v572, %v508
        %v574 = vrot.slane %v573, 4
        %v575 = vadd.f32 %v573, %v574
        %v576 = vrot.slane %v575, 2
        %v577 = vadd.f32 %v575, %v576
        %v578 = vrot.slane %v577, 1
        %v579 = vadd.f32 %v577, %v578
        %v580 = vmul.f32 %v353, %v353
        %v581 = vmul.f32 %v358, %v358
        %v582 = vmul.f32 %v363, %v363
        %v583 = vmul.f32 %v368, %v368
        %v584 = vmul.f32 %v373, %v373
        %v585 = vmul.f32 %v378, %v378
        %v586 = vmul.f32 %v383, %v383
        %v587 = vmul.f32 %v388, %v388
        %v588 = vmul.f32 %v393, %v393
        %v589 = vmul.f32 %v398, %v398
        %v590 = vmul.f32 %v403, %v403
        %v591 = vmul.f32 %v408, %v408
        %v592 = vmul.f32 %v413, %v413
        %v593 = vmul.f32 %v418, %v418
        %v594 = vmul.f32 %v423, %v423
        %v595 = vmul.f32 %v428, %v428
        %v596 = vmul.f32 %v433, %v433
        %v597 = vmul.f32 %v438, %v438
        %v598 = vmul.f32 %v443, %v443
        %v599 = vmul.f32 %v448, %v448
        %v600 = vmul.f32 %v453, %v453
        %v601 = vmul.f32 %v458, %v458
        %v602 = vmul.f32 %v463, %v463
        %v603 = vmul.f32 %v468, %v468
        %v604 = vmul.f32 %v473, %v473
        %v605 = vmul.f32 %v478, %v478
        %v606 = vmul.f32 %v483, %v483
        %v607 = vmul.f32 %v488, %v488
        %v608 = vmul.f32 %v493, %v493
        %v609 = vmul.f32 %v498, %v498
        %v610 = vmul.f32 %v503, %v503
        %v611 = vmul.f32 %v508, %v508
        %v612 = vadd.f32 %v580, %v581
        %v613 = vadd.f32 %v612, %v582
        %v614 = vadd.f32 %v613, %v583
        %v615 = vadd.f32 %v614, %v584
        %v616 = vadd.f32 %v615, %v585
        %v617 = vadd.f32 %v616, %v586
        %v618 = vadd.f32 %v617, %v587
        %v619 = vadd.f32 %v618, %v588
        %v620 = vadd.f32 %v619, %v589
        %v621 = vadd.f32 %v620, %v590
        %v622 = vadd.f32 %v621, %v591
        %v623 = vadd.f32 %v622, %v592
        %v624 = vadd.f32 %v623, %v593
        %v625 = vadd.f32 %v624, %v594
        %v626 = vadd.f32 %v625, %v595
        %v627 = vadd.f32 %v626, %v596
        %v628 = vadd.f32 %v627, %v597
        %v629 = vadd.f32 %v628, %v598
        %v630 = vadd.f32 %v629, %v599
        %v631 = vadd.f32 %v630, %v600
        %v632 = vadd.f32 %v631, %v601
        %v633 = vadd.f32 %v632, %v602
        %v634 = vadd.f32 %v633, %v603
        %v635 = vadd.f32 %v634, %v604
        %v636 = vadd.f32 %v635, %v605
        %v637 = vadd.f32 %v636, %v606
        %v638 = vadd.f32 %v637, %v607
        %v639 = vadd.f32 %v638, %v608
        %v640 = vadd.f32 %v639, %v609
        %v641 = vadd.f32 %v640, %v610
        %v642 = vadd.f32 %v641, %v611
        %v643 = vrot.slane %v642, 4
        %v644 = vadd.f32 %v642, %v643
        %v645 = vrot.slane %v644, 2
        %v646 = vadd.f32 %v644, %v645
        %v647 = vrot.slane %v646, 1
        %v648 = vadd.f32 %v646, %v647
        %vm649 = vcmask 1040384
        %v650 = vsel %vm649, %v579, %v648
        %651 = vst [vmem:[%s235] sm:$0x3] %v650
        %s652 = sand.u32 %s96, 1
        %s653 = scalar_lea.sflag [#allocation4], %s652
        %s654 = sand.u32 %s96, 1
        %s655 = smul.addr %s654, 256
        %s656 = scalar_lea.vmem [#allocation7], %s655
        %s657 = sand.u32 %s124, 1
        %s658 = scalar_lea.sflag [#allocation9], %s657
        %s659 = sand.u32 %s124, 1
        %s660 = smul.addr %s659, 2
        %s661 = scalar_lea.vmem [#allocation8], %s660
        // Predicated region
        $region37: #{tpu_custom_call.1} parent=27 // pred_check
          %p662 = pneg %p106
        $region38: #{tpu_custom_call.1} parent=27 // pred_check_branch
          %664 = sbr.rel (%p662) target = $region40
        $region39: #{tpu_custom_call.1} parent=27 // pred_region
          %s665 = smul.u32 16, %s30
          %s667 = ssub.s32 4096, 4096
          %668 = vsyncadd %s653, %s667
          %s669 = smul.addr %s665, 2
          %s670 = smul.addr %s29, 32
          %s671 = sadd.s32 %s669, %s670
          %s672 = smul.addr %s671, 128
          %s673 = scalar_lea.hbm %s2, %s672
          %s674 = sshll.u32 %s656, 4
          %s675 = int_to_ptr.vmem [resolvable:$true] %s674
          %680 = dma.vmem_to_hbm [thread:$0]  %s675, 4096, %s673, %s653, 128, 128, 8
        $region40: #{tpu_custom_call.1} parent=27 // pred_fallthru
          _
        // Predicated region
        $region41: #{tpu_custom_call.1} parent=27 // pred_check
          %p681 = pneg %p134
        $region42: #{tpu_custom_call.1} parent=27 // pred_check_branch
          %683 = sbr.rel (%p681) target = $region44
        $region43: #{tpu_custom_call.1} parent=27 // pred_region
          %s685 = ssub.s32 32, 32
          %686 = vsyncadd %s658, %s685
          %s687 = sadd.s32 %s30, %s29
          %s688 = smul.addr %s687, 32
          %s689 = scalar_lea.hbm %s3, %s688
          %s691 = sshll.u32 %s661, 4
          %s692 = int_to_ptr.vmem [resolvable:$true] %s691
          %694 = dma.vmem_to_hbm [thread:$0]  %s692, 32, %s689, %s658
        $region44: #{tpu_custom_call.1} parent=27 // pred_fallthru
          _
      $region28: #{tpu_custom_call.1} parent=5 // pred_fallthru
        _
      %p695 = scmp.le.s32.totalorder 2, %s20
      // Predicated region
      $region45: #{tpu_custom_call.1} parent=5 // pred_check
        %p696 = pneg %p695
      $region46: #{tpu_custom_call.1} parent=5 // pred_check_branch
        %698 = sbr.rel (%p696) target = $region48
      $region47: #{tpu_custom_call.1} parent=5 // pred_region
        %s699 = ssub.s32 %s20, 2
        // Predicated region
        $region49: #{tpu_custom_call.1} parent=47 // pred_check
          %p700 = pneg %p112
        $region50: #{tpu_custom_call.1} parent=47 // pred_check_branch
          %702 = sbr.rel (%p700) target = $region52
        $region51: #{tpu_custom_call.1} parent=47 // pred_region
          %s703 = sand.u32 %s97, 1
          %s704 = scalar_lea.sflag [#allocation4], %s703
          %s705 = sand.u32 %s97, 1
          %s706 = smul.addr %s705, 256
          %s707 = scalar_lea.vmem [#allocation7], %s706
          %708 = dma.done %s704, 4096
        $region52: #{tpu_custom_call.1} parent=47 // pred_fallthru
          _
        // Predicated region
        $region53: #{tpu_custom_call.1} parent=47 // pred_check
          %p709 = pneg %p140
        $region54: #{tpu_custom_call.1} parent=47 // pred_check_branch
          %711 = sbr.rel (%p709) target = $region56
        $region55: #{tpu_custom_call.1} parent=47 // pred_region
          %s712 = sand.u32 %s125, 1
          %s713 = scalar_lea.sflag [#allocation9], %s712
          %s714 = sand.u32 %s125, 1
          %s715 = smul.addr %s714, 2
          %s716 = scalar_lea.vmem [#allocation8], %s715
          %717 = dma.done %s713, 32
        $region56: #{tpu_custom_call.1} parent=47 // pred_fallthru
          _
      $region48: #{tpu_custom_call.1} parent=5 // pred_fallthru
        _
    $region6: #{tpu_custom_call.1} parent=1 // loop_footer
      %s24 = sadd.s32 1, %s20
    $region7: #{tpu_custom_call.1} parent=1 // loop_footer_branch
      %19 = sbr.rel target = $region3
    $region8: #{tpu_custom_call.1} parent=1 // loop_exit
      _
    %718 = vsyncpa [#allocation3], 1
    %s719 = scalar_lea.sflag [#allocation3], 1
    %720 = vsyncpa %s719, 1
    %721 = vsyncpa [#allocation6], 1
    %722 = vsyncpa [#allocation4], 1
    %s723 = scalar_lea.sflag [#allocation4], 1
    %724 = vsyncpa %s723, 1
    %725 = vsyncpa [#allocation9], 1
    %s726 = scalar_lea.sflag [#allocation9], 1
    %727 = vsyncpa %s726, 1

</llo_original>
